<compile_context>
chip_gen: v7x
topology: tpu7x:2x2x1
jax: 0.10.0
libtpu: 0.0.40
codegen_flags: <defaults>
</compile_context>

<pallas_src>
import jax
import jax.numpy as jnp
from jax.experimental import pallas as pl
from jax.experimental.pallas import tpu as pltpu

NEG_SLOPE = 0.01  # nn.LeakyReLU default negative_slope

_VMEM_TILE_BUDGET = 40 * 1024 * 1024   # working-set target (fits v7x 64 MiB physical VMEM)
_VMEM_LIMIT_BYTES = 48 * 1024 * 1024   # explicit scoped limit (v5e default is only 16 MiB)


# --------------------------------------------------------------------------------------
# Pallas kernel: out[:, b*d_pad:(b+1)*d_pad] = W[b] @ x_r, tiled + accumulated in-place.
# grid = (branch, n-tile, r-tile); reduction over the (innermost) r-tile axis.
# x_r is a single VMEM-resident block (constant index_map); sliced per r-step with pl.ds.
# --------------------------------------------------------------------------------------
def _r2e_matmul_kernel(w_ref, xr_ref, out_ref):
    r = pl.program_id(2)
    tr = w_ref.shape[1]  # static r-tile size

    @pl.when(r == 0)
    def _init():
        out_ref[...] = jnp.zeros_like(out_ref)

    r0 = pl.multiple_of(r * tr, tr)
    out_ref[...] += jnp.dot(w_ref[...], xr_ref[pl.ds(r0, tr), :],
                            preferred_element_type=jnp.float32)


def _round_up(x, m):
    return ((x + m - 1) // m) * m


def _cdiv(a, b):
    return (a + b - 1) // b


def _leaky_relu(x, slope=NEG_SLOPE):
    return jnp.where(x > 0, x, slope * x)


def _pick_tiles(N, R, d_pad, itemsize, tile_n, tile_r):
    """Balanced tiles (minimal padding) that fit the VMEM working-set budget."""
    def balance(dim, cap, align):
        ntiles = _cdiv(_round_up(dim, align), cap)
        t = _round_up(_cdiv(dim, ntiles), align)
        return t, t * ntiles

    cap_n, cap_r = tile_n, tile_r
    while True:
        tn, n_pad = balance(N, cap_n, 8)
        tr, r_pad = balance(R, cap_r, 128)
        need = (2 * tn * tr * itemsize          # double-buffered W stream
                + 2 * r_pad * d_pad * itemsize  # resident x_r (counted with 2 buffers)
                + 2 * tn * d_pad * 4)           # resident f32 output block (2 buffers)
        if need <= _VMEM_TILE_BUDGET or (cap_n <= 8 and cap_r <= 128):
            return tn, n_pad, tr, r_pad
        if cap_n > 8 and (cap_n >= cap_r or cap_r <= 128):
            cap_n = max(8, _round_up(cap_n // 2, 8))
        else:
            cap_r = max(128, _round_up(cap_r // 2, 128))


def r2e_forward(params, x_e, x_r, edge_index, rel, *,
                mxu_dtype=jnp.bfloat16, tile_n=1024, tile_r=1024, residual=False):
    """Forward pass of R2E (eval mode). Shapes are static -> jit-safe, no host syncs."""
    assert tile_n % 8 == 0 and tile_n >= 8, "tile_n must be a positive multiple of 8"
    assert tile_r % 128 == 0 and tile_r >= 128, "tile_r must be a positive multiple of 128"

    f32 = jnp.float32
    N = x_e.shape[0]
    R, r_hidden = x_r.shape
    edge_h = edge_index[0]
    edge_t = edge_index[1]

    x_e32 = x_e.astype(f32)
    x_r32 = x_r.astype(f32)

    # --- node / relation level attention projections (never edge-level feature slabs) ----
    s_h = x_e32 @ params["a_h"].astype(f32).T          # (N, H)
    s_t = x_e32 @ params["a_t"].astype(f32).T          # (N, H)
    s_r = x_r32 @ params["a_r"].astype(f32).T          # (R, H)

    # --- per-edge, head-averaged segment softmax; edges sorted by destination once -------
    def branch_weights(s_node, seg):
        order = jnp.argsort(seg)
        seg_s = seg[order]
        rel_s = rel[order]
        logits = _leaky_relu(s_node[seg_s] + s_r[rel_s])                       # (E, H)
        seg_max = jax.ops.segment_max(logits, seg_s, num_segments=N,
                                      indices_are_sorted=True)                 # (N, H)
        ex = jnp.exp(logits - seg_max[seg_s])                                   # (E, H)
        seg_sum = jax.ops.segment_sum(ex, seg_s, num_segments=N,
                                      indices_are_sorted=True)                  # (N, H)
        p = jnp.mean(ex / seg_sum[seg_s], axis=1)                               # (E,)
        return seg_s, rel_s, p

    seg_h, rel_h, p_h = branch_weights(s_h, edge_h)
    seg_t, rel_t, p_t = branch_weights(s_t, edge_t)

    # --- tile / pad selection -------------------------------------------------------------
    d_pad = _round_up(r_hidden, 128)
    itemsize = jnp.dtype(mxu_dtype).itemsize
    tn, n_pad, tr, r_pad = _pick_tiles(N, R, d_pad, itemsize, tile_n, tile_r)

    # --- build W directly in padded, stacked layout (duplicate (node,rel) pairs accumulate)
    w_all = (jnp.zeros((2, n_pad, r_pad), f32)
             .at[0, seg_h, rel_h].add(p_h)
             .at[1, seg_t, rel_t].add(p_t)
             .astype(mxu_dtype))
    xr_pad = jnp.zeros((r_pad, d_pad), mxu_dtype).at[:R, :r_hidden].set(
        x_r.astype(mxu_dtype))

    grid = (2, n_pad // tn, r_pad // tr)
    out_pad = pl.pallas_call(
        _r2e_matmul_kernel,
        out_shape=jax.ShapeDtypeStruct((n_pad, 2 * d_pad), f32),
        grid_spec=pltpu.PrefetchScalarGridSpec(
            num_scalar_prefetch=0,
            grid=grid,
            in_specs=[
                # W tile: branch dim squeezed -> kernel sees a 2-D (tn, tr) MXU operand.
                pl.BlockSpec((pl.Squeezed(), tn, tr), lambda b, n, r: (b, n, r)),
                # x_r: one VMEM-resident block, fetched once (constant block index).
                pl.BlockSpec((r_pad, d_pad), lambda b, n, r: (0, 0)),
            ],
            out_specs=pl.BlockSpec((tn, d_pad), lambda b, n, r: (n, b)),
        ),
        compiler_params=pltpu.CompilerParams(
            dimension_semantics=("parallel", "parallel", "arbitrary"),
            vmem_limit_bytes=_VMEM_LIMIT_BYTES,
        ),
    )(w_all, xr_pad)

    # concat([x_e_h, x_e_t], dim=1); drop lane/row padding.
    out = jnp.concatenate(
        [out_pad[:N, :r_hidden], out_pad[:N, d_pad:d_pad + r_hidden]], axis=1)

    if residual:
        out = (out @ params["residual_w"].astype(f32).T
               + params["residual_b"].astype(f32) + x_e32)
    return out


# --------------------------------------------------------------------------------------
# Pure-JAX reference mirroring the torch forward (eval mode), for correctness checking.
# --------------------------------------------------------------------------------------
def r2e_reference(params, x_e, x_r, edge_index, rel):
    N = x_e.shape[0]
    edge_h, edge_t = edge_index[0], edge_index[1]
    H = params["a_h"].shape[0]

    def seg_softmax(logits, seg):
        m = jax.ops.segment_max(logits, seg, num_segments=N)
        ex = jnp.exp(logits - m[seg])
        z = jax.ops.segment_sum(ex, seg, num_segments=N)
        return ex / z[seg]

    out_h = jnp.zeros((N, x_r.shape[1]), jnp.float32)
    out_t = jnp.zeros((N, x_r.shape[1]), jnp.float32)
    for k in range(H):
        e_h = (x_e @ params["a_h"][k])[edge_h]
        e_t = (x_e @ params["a_t"][k])[edge_t]
        e_r = (x_r @ params["a_r"][k])[rel]
        a_h = seg_softmax(jax.nn.leaky_relu(e_h + e_r, NEG_SLOPE), edge_h)
        a_t = seg_softmax(jax.nn.leaky_relu(e_t + e_r, NEG_SLOPE), edge_t)
        out_h = out_h + jax.ops.segment_sum(a_h[:, None] * x_r[rel], edge_h,
                                            num_segments=N)
        out_t = out_t + jax.ops.segment_sum(a_t[:, None] * x_r[rel], edge_t,
                                            num_segments=N)
    return jnp.concatenate([out_h / H, out_t / H], axis=1)


if __name__ == "__main__":
    key = jax.random.PRNGKey(0)
    N, E = 24, 64
    e_hidden, r_hidden, R, H = 32, 32, 6, 4
    ks = jax.random.split(key, 7)

    params = {
        "a_h": jax.random.normal(ks[0], (H, e_hidden), jnp.float32) * 0.1,
        "a_t": jax.random.normal(ks[1], (H, e_hidden), jnp.float32) * 0.1,
        "a_r": jax.random.normal(ks[2], (H, r_hidden), jnp.float32) * 0.1,
    }
    x_e = jax.random.normal(ks[3], (N, e_hidden), jnp.float32)
    x_r = jax.random.normal(ks[4], (R, r_hidden), jnp.float32)
    edge_index = jax.random.randint(ks[5], (2, E), 0, N, dtype=jnp.int32)
    rel = jax.random.randint(ks[6], (E,), 0, R, dtype=jnp.int32)

    ref = r2e_reference(params, x_e, x_r, edge_index, rel)

    # f32 MXU operands: tight tolerance.
    out_f32 = jax.block_until_ready(
        r2e_forward(params, x_e, x_r, edge_index, rel, mxu_dtype=jnp.float32))
    assert out_f32.shape == (N, 2 * r_hidden), out_f32.shape
    assert jnp.allclose(out_f32, ref, rtol=1e-4, atol=1e-4), \
        float(jnp.max(jnp.abs(out_f32 - ref)))

    # bf16 MXU operands (default fast path): loose tolerance.
    out_bf16 = jax.block_until_ready(
        r2e_forward(params, x_e, x_r, edge_index, rel))
    assert out_bf16.shape == (N, 2 * r_hidden), out_bf16.shape
    assert jnp.allclose(out_bf16, ref, rtol=5e-2, atol=5e-2), \
        float(jnp.max(jnp.abs(out_bf16 - ref)))

    print("KERNEL_OK")
</pallas_src>

<mosaic_0001>
module attributes {stable_mosaic.version = 11 : i64} {
  func.func @_r2e_matmul_kernel(%arg0: i32, %arg1: i32, %arg2: i32, %arg3: memref<1x24x128xf32, #tpu.memory_space<vmem>>, %arg4: memref<128x128xf32, #tpu.memory_space<vmem>>, %arg5: memref<24x128xf32, #tpu.memory_space<vmem>>) attributes {dimension_semantics = [#tpu.dimension_semantics<parallel>, #tpu.dimension_semantics<parallel>, #tpu.dimension_semantics<arbitrary>], iteration_bounds = array<i64: 2, 1, 1>, scalar_prefetch = 0 : i64, scratch_operands = 0 : i64, tpu.core_type = #tpu.core_type<tc>, window_params = [{transform_indices = @transform_0, window_bounds = array<i64: 1, 24, 128>}, {pipeline_mode = #tpu.pipeline_mode<synchronous>, transform_indices = @transform_1, window_bounds = array<i64: 128, 128>}, {transform_indices = @transform_2, window_bounds = array<i64: 24, 128>}]} {
    %c0_i32 = arith.constant 0 : i32
    %0 = arith.cmpi eq, %arg2, %c0_i32 : i32
    %1 = arith.extui %0 : i1 to i32
    %c0_i32_0 = arith.constant 0 : i32
    %2 = arith.cmpi ne, %1, %c0_i32_0 : i32
    scf.if %2 {
      %cst_8 = arith.constant 0.000000e+00 : f32
      %13 = vector.broadcast %cst_8 : f32 to vector<24x128xf32>
      %c0_9 = arith.constant 0 : index
      %c0_10 = arith.constant 0 : index
      %14 = vector.load %arg5[%c0_9, %c0_10] : memref<24x128xf32, #tpu.memory_space<vmem>>, vector<24x128xf32>
      tpu.vector_store %arg5[%c0_9, %c0_10], %13 {strides = array<i32>} : memref<24x128xf32, #tpu.memory_space<vmem>>, vector<24x128xf32>,
    } else {
    }
    %c128_i32 = arith.constant 128 : i32
    %3 = arith.muli %arg2, %c128_i32 : i32
    %4 = tpu.assume_multiple %3, 128 : i32
    %c0 = arith.constant 0 : index
    %c0_1 = arith.constant 0 : index
    %5 = vector.load %arg5[%c0, %c0_1] : memref<24x128xf32, #tpu.memory_space<vmem>>, vector<24x128xf32>
    %c0_2 = arith.constant 0 : index
    %c0_3 = arith.constant 0 : index
    %c0_4 = arith.constant 0 : index
    %6 = vector.load %arg3[%c0_2, %c0_3, %c0_4] : memref<1x24x128xf32, #tpu.memory_space<vmem>>, vector<1x24x128xf32>
    %7 = vector.shape_cast %6 : vector<1x24x128xf32> to vector<24x128xf32>
    %8 = arith.index_cast %4 : i32 to index
    %c0_5 = arith.constant 0 : index
    %9 = vector.load %arg4[%8, %c0_5] : memref<128x128xf32, #tpu.memory_space<vmem>>, vector<128x128xf32>
    %cst = arith.constant dense<0.000000e+00> : vector<24x128xf32>
    %10 = tpu.matmul %7, %9, %cst {dimension_numbers = #tpu.dot_dimension_numbers<[1], [0], [0], [1], [0, 0, 1, 1], [], []>} : vector<24x128xf32>, vector<128x128xf32>, vector<24x128xf32> -> vector<24x128xf32>
    %11 = arith.addf %5, %10 : vector<24x128xf32>
    %c0_6 = arith.constant 0 : index
    %c0_7 = arith.constant 0 : index
    %12 = vector.load %arg5[%c0_6, %c0_7] : memref<24x128xf32, #tpu.memory_space<vmem>>, vector<24x128xf32>
    tpu.vector_store %arg5[%c0_6, %c0_7], %11 {strides = array<i32>} : memref<24x128xf32, #tpu.memory_space<vmem>>, vector<24x128xf32>,
    return
  }
  func.func @transform_0(%arg0: i32, %arg1: i32, %arg2: i32) -> (i32, i32, i32) {
    %c0_i32 = arith.constant 0 : i32
    return %arg0, %arg1, %arg2 : i32, i32, i32
  }
  func.func @transform_1(%arg0: i32, %arg1: i32, %arg2: i32) -> (i32, i32) {
    %c0_i32 = arith.constant 0 : i32
    %c0_i32_0 = arith.constant 0 : i32
    %c0_i32_1 = arith.constant 0 : i32
    return %c0_i32, %c0_i32_0 : i32, i32
  }
  func.func @transform_2(%arg0: i32, %arg1: i32, %arg2: i32) -> (i32, i32) {
    %c0_i32 = arith.constant 0 : i32
    return %arg1, %arg0 : i32, i32
  }
}

</mosaic_0001>

<llo_original>
// kernel: tpu_custom_call.1
$region0: #{tpu_custom_call.1}
  #allocation0 [shape = 'u32[]', space=smem, size = 0x4, offset = 0x4, fixed_abs, tag = 'smem constant byte address 0x4 - core index']
  #allocation1 [shape = 'u32[144,128]{1,0:T(1,128)}', space=vmem, size = 0x12000, scoped, tag = 'internal scratch']
  %s0 = inlined_call_operand.hbm [shape: f32[2,24,128], index: 0, kind: input, shape index: {}]
  %s1 = inlined_call_operand.hbm [shape: f32[128,128], index: 1, kind: input, shape index: {}]
  %s2 = inlined_call_operand.hbm [shape: f32[24,256], index: 2, kind: output, shape index: {}]
  %s3 = sld [smem:[#allocation0]]
  $region53: #{tpu_custom_call.1} parent=0
    _
  %s5 = ssub.s32 1, %s3
  %s6 = scalar_select 0, %s5, %s3
  $region1: #{tpu_custom_call.1} parent=0
    #allocation2 [shape = 'u8[24576]{0}', space=vmem, size = 0x6000, scoped, tag = 'input window, operand 0']
    #allocation3 [shape = 's32[2]{0}', space=sflag, size = 0x8, scoped, tag = 'scoped memory for tpu_custom_call.1']
    #allocation4 [shape = 's32[2]{0}', space=sflag, size = 0x8, scoped, tag = 'scoped memory for tpu_custom_call.1']
    #allocation5 [shape = 'u8[65536]{0}', space=vmem, size = 0x10000, scoped, tag = 'input window, operand 1, single buffered']
    #allocation6 [shape = 's32[1]{0}', space=sflag, size = 0x4, scoped, tag = 'scoped memory for tpu_custom_call.1']
    #allocation7 [shape = 'u8[24576]{0}', space=vmem, size = 0x6000, scoped, tag = 'output window, operand 0']
    %7 = vsyncpa [#allocation3], 0
    %s8 = scalar_lea.sflag [#allocation3], 1
    %9 = vsyncpa %s8, 0
    %10 = vsyncpa [#allocation6], 0
    %11 = vsyncpa [#allocation4], 0
    %s12 = scalar_lea.sflag [#allocation4], 1
    %13 = vsyncpa %s12, 0
    loop: start=0, step=1, limit=4
    $region2: #{tpu_custom_call.1} parent=1 // loop_pre_header
      _
    $region3: #{tpu_custom_call.1} parent=1 // loop_header
      %s15 = sphi 0, %s19
      %p16 = scmp.ge.s32.totalorder %s15, 4
      %s22 = sphi 0, %s41
      %s23 = sphi 0, %s37
      %s24 = sphi 0, %s33
      %s25 = sphi 0, %s22
      %s26 = sphi 0, %s23
      %s27 = sphi 0, %s24
      %s28 = sphi 0, %s25
      %s29 = sphi 0, %s26
      %s30 = sphi 0, %s27
      %s48 = sphi 0, %s50
      %s51 = sphi 0, %s48
      %s52 = sphi 0, %s51
      %s68 = sphi 0, %s52
      %s72 = sphi 0, %s72
      %s74 = sphi 0, %s72
      %s75 = sphi 0, %s74
      %s89 = sphi 0, %s75
      %s97 = sphi 0, %s99
      %s100 = sphi 0, %s97
      %s101 = sphi 0, %s100
      %s117 = sphi 0, %s101
    $region4: #{tpu_custom_call.1} parent=1 // loop_header_branch
      %18 = sbr.rel (%p16) target = $region8
    $region5: #{tpu_custom_call.1} parent=1 // loop_body
      %s20 = ssub.s32 %s15, 1
      %s21 = ssub.s32 %s15, 2
      %s31 = sadd.s32 1, %s24
      %p32 = scmp.ge.s32.totalorder %s31, 1
      %s33 = scalar_select %p32, 0, %s31
      %s34 = sadd.s32 1, %s23
      %s35 = scalar_select %p32, %s34, %s23
      %p36 = scmp.ge.s32.totalorder %s35, 1
      %s37 = scalar_select %p36, 0, %s35
      %s38 = sadd.s32 1, %s22
      %s39 = scalar_select %p36, %s38, %s22
      %p40 = scmp.ge.s32.totalorder %s39, 2
      %s41 = scalar_select %p40, 0, %s39
      %s42 = ssub.s32 %s22, %s41
      %s43 = ssub.s32 %s23, %s37
      %s44 = sor.u32 %s42, %s43
      %s45 = ssub.s32 %s24, %s33
      %s46 = sor.u32 %s44, %s45
      %p47 = scmp.eq.s32.totalorder %s46, 0
      %s49 = sadd.s32 %s48, 1
      %s50 = scalar_select %p47, %s48, %s49
      %p53 = pneg %p47
      %p54 = scmp.eq.s32.totalorder %s15, 1
      %p55 = por %p53, %p54
      %p56 = scmp.ne.s32.totalorder %s48, %s51
      %p57 = scmp.eq.s32.totalorder %s15, 0
      %p58 = por %p56, %p57
      %p59 = scmp.ne.s32.totalorder %s48, %s51
      %p60 = scmp.eq.s32.totalorder %s20, 1
      %p61 = por %p59, %p60
      %p62 = scmp.ne.s32.totalorder %s51, %s52
      %p63 = scmp.eq.s32.totalorder %s20, 0
      %p64 = por %p62, %p63
      %p65 = scmp.ne.s32.totalorder %s51, %s52
      %p66 = scmp.eq.s32.totalorder %s21, 1
      %p67 = por %p65, %p66
      %p69 = scmp.ne.s32.totalorder %s52, %s68
      %p70 = scmp.eq.s32.totalorder %s21, 0
      %p71 = por %p69, %p70
      %s73 = sadd.s32 %s72, 1
      %p76 = scmp.eq.s32.totalorder %s15, 1
      %p77 = scmp.ne.s32.totalorder %s72, %s74
      %p78 = scmp.eq.s32.totalorder %s15, 0
      %p79 = por %p77, %p78
      %p80 = scmp.ne.s32.totalorder %s72, %s74
      %p81 = scmp.eq.s32.totalorder %s20, 1
      %p82 = por %p80, %p81
      %p83 = scmp.ne.s32.totalorder %s74, %s75
      %p84 = scmp.eq.s32.totalorder %s20, 0
      %p85 = por %p83, %p84
      %p86 = scmp.ne.s32.totalorder %s74, %s75
      %p87 = scmp.eq.s32.totalorder %s21, 1
      %p88 = por %p86, %p87
      %p90 = scmp.ne.s32.totalorder %s75, %s89
      %p91 = scmp.eq.s32.totalorder %s21, 0
      %p92 = por %p90, %p91
      %s93 = ssub.s32 %s23, %s37
      %s94 = ssub.s32 %s22, %s41
      %s95 = sor.u32 %s93, %s94
      %p96 = scmp.eq.s32.totalorder %s95, 0
      %s98 = sadd.s32 %s97, 1
      %s99 = scalar_select %p96, %s97, %s98
      %p102 = pneg %p96
      %p103 = scmp.eq.s32.totalorder %s15, 1
      %p104 = por %p102, %p103
      %p105 = scmp.ne.s32.totalorder %s97, %s100
      %p106 = scmp.eq.s32.totalorder %s15, 0
      %p107 = por %p105, %p106
      %p108 = scmp.ne.s32.totalorder %s97, %s100
      %p109 = scmp.eq.s32.totalorder %s20, 1
      %p110 = por %p108, %p109
      %p111 = scmp.ne.s32.totalorder %s100, %s101
      %p112 = scmp.eq.s32.totalorder %s20, 0
      %p113 = por %p111, %p112
      %p114 = scmp.ne.s32.totalorder %s100, %s101
      %p115 = scmp.eq.s32.totalorder %s21, 1
      %p116 = por %p114, %p115
      %p118 = scmp.ne.s32.totalorder %s101, %s117
      %p119 = scmp.eq.s32.totalorder %s21, 0
      %p120 = por %p118, %p119
      %p121 = scmp.le.s32.totalorder 1, %s15
      %p122 = scmp.lt.s32.totalorder %s15, 3
      %p123 = pnand %p121, %p122
      %p124 = pneg %p123
      // Predicated region
      $region9: #{tpu_custom_call.1} parent=5 // pred_check
        _
      $region10: #{tpu_custom_call.1} parent=5 // pred_check_branch
        %126 = sbr.rel (%p123) target = $region12
      $region11: #{tpu_custom_call.1} parent=5 // pred_region
        %s127 = ssub.s32 %s15, 1
        // Predicated region
        $region13: #{tpu_custom_call.1} parent=11 // pred_check
          %p128 = pneg %p85
        $region14: #{tpu_custom_call.1} parent=11 // pred_check_branch
          %130 = sbr.rel (%p128) target = $region16
        $region15: #{tpu_custom_call.1} parent=11 // pred_region
          %s132 = ssub.s32 2048, 2048
          %133 = vsyncadd [#allocation6], %s132
          %s134 = sshll.u32 [#allocation5], 4
          %s135 = int_to_ptr.vmem [resolvable:$true] %s134
          %140 = dma.hbm_to_vmem [thread:$0]  %s1, 2048, %s135, [#allocation6], 128, 128, 8
        $region16: #{tpu_custom_call.1} parent=11 // pred_fallthru
          _
      $region12: #{tpu_custom_call.1} parent=5 // pred_fallthru
        _
      %p141 = scmp.lt.s32.totalorder %s15, 2
      // Predicated region
      $region17: #{tpu_custom_call.1} parent=5 // pred_check
        %p142 = pneg %p141
      $region18: #{tpu_custom_call.1} parent=5 // pred_check_branch
        %144 = sbr.rel (%p142) target = $region20
      $region19: #{tpu_custom_call.1} parent=5 // pred_region
        // Predicated region
        $region21: #{tpu_custom_call.1} parent=19 // pred_check
          %p145 = pneg %p58
        $region22: #{tpu_custom_call.1} parent=19 // pred_check_branch
          %147 = sbr.rel (%p145) target = $region24
        $region23: #{tpu_custom_call.1} parent=19 // pred_region
          %s148 = sand.u32 %s48, 1
          %s149 = scalar_lea.sflag [#allocation3], %s148
          %s150 = sand.u32 %s48, 1
          %s151 = smul.addr %s150, 24
          %s152 = scalar_lea.vmem [#allocation2], %s151
          %s153 = smul.u32 3, %s23
          %s155 = ssub.s32 384, 384
          %156 = vsyncadd %s149, %s155
          %s157 = sadd.s32 %s24, %s153
          %s158 = smul.addr %s22, 3
          %s159 = sadd.s32 %s157, %s158
          %s160 = smul.addr %s159, 128
          %s161 = scalar_lea.hbm %s0, %s160
          %s162 = sshll.u32 %s152, 4
          %s163 = int_to_ptr.vmem [resolvable:$true] %s162
          %168 = dma.hbm_to_vmem [thread:$0]  %s161, 384, %s163, %s149, 128, 128, 8
        $region24: #{tpu_custom_call.1} parent=19 // pred_fallthru
          _
      $region20: #{tpu_custom_call.1} parent=5 // pred_fallthru
        _
      %p169 = scmp.le.s32.totalorder 1, %s15
      %p170 = scmp.lt.s32.totalorder %s15, 3
      %p171 = pnand %p169, %p170
      %p172 = pneg %p171
      // Predicated region
      $region25: #{tpu_custom_call.1} parent=5 // pred_check
        _
      $region26: #{tpu_custom_call.1} parent=5 // pred_check_branch
        %174 = sbr.rel (%p171) target = $region28
      $region27: #{tpu_custom_call.1} parent=5 // pred_region
        %s175 = ssub.s32 %s15, 1
        %s176 = sand.u32 %s51, 1
        %s177 = scalar_lea.sflag [#allocation3], %s176
        %s178 = sand.u32 %s51, 1
        %s179 = smul.addr %s178, 24
        %s180 = scalar_lea.vmem [#allocation2], %s179
        // Predicated region
        $region29: #{tpu_custom_call.1} parent=27 // pred_check
          %p181 = pneg %p64
        $region30: #{tpu_custom_call.1} parent=27 // pred_check_branch
          %183 = sbr.rel (%p181) target = $region32
        $region31: #{tpu_custom_call.1} parent=27 // pred_region
          %184 = dma.done %s177, 384
        $region32: #{tpu_custom_call.1} parent=27 // pred_fallthru
          _
        // Predicated region
        $region33: #{tpu_custom_call.1} parent=27 // pred_check
          %p185 = pneg %p85
        $region34: #{tpu_custom_call.1} parent=27 // pred_check_branch
          %187 = sbr.rel (%p185) target = $region36
        $region35: #{tpu_custom_call.1} parent=27 // pred_region
          %188 = dma.done [#allocation6], 2048
        $region36: #{tpu_custom_call.1} parent=27 // pred_fallthru
          _
        %s189 = sand.u32 %s51, 1
        %s190 = scalar_lea.sflag [#allocation3], %s189
        %s191 = sand.u32 %s51, 1
        %s192 = smul.addr %s191, 24
        %s193 = scalar_lea.vmem [#allocation2], %s192
        %p194 = pneg %p64
        %p195 = pneg %p61
        %p196 = pneg %p85
        %p197 = pneg %p82
        %p198 = pneg %p113
        %p199 = pneg %p110
        %s200 = sand.u32 %s100, 1
        %s201 = scalar_lea.sflag [#allocation4], %s200
        %s202 = sand.u32 %s100, 1
        %s203 = smul.addr %s202, 24
        %s204 = scalar_lea.vmem [#allocation7], %s203
        %s205 = smul.u32 3, %s26
        %s206 = smul.u32 3, %s26
        %p207 = scmp.eq.s32.totalorder %s27, 0
        // Predicated region
        $region37: #{tpu_custom_call.1} parent=27 // pred_check
          %p208 = pneg %p207
        $region38: #{tpu_custom_call.1} parent=27 // pred_check_branch
          %210 = sbr.rel (%p208) target = $region40
        $region39: #{tpu_custom_call.1} parent=27 // pred_region
          %211 = vst [vmem:[%s204] sm:$0xff] 0.0
          %212 = vst [vmem:[%s204 + $0x8] sm:$0xff] 0.0
          %213 = vst [vmem:[%s204 + $0x10] sm:$0xff] 0.0
        $region40: #{tpu_custom_call.1} parent=27 // pred_fallthru
          _
        %s214 = smul.u32 %s27, 128
        %v215 = vld [vmem:[%s204] sm:$0xff]
        %v216 = vld [vmem:[%s204 + $0x8] sm:$0xff]
        %v217 = vld [vmem:[%s204 + $0x10] sm:$0xff]
        %v218 = vld [vmem:[%s180] sm:$0xff]
        %v219 = vld [vmem:[%s180 + $0x8] sm:$0xff]
        %v220 = vld [vmem:[%s180 + $0x10] sm:$0xff]
        %s221 = scalar_lea.vmem [#allocation5], %s214
        %v222 = vld [vmem:[%s221] sm:$0xff]
        %v223 = vld [vmem:[%s221 + $0x8] sm:$0xff]
        %v224 = vld [vmem:[%s221 + $0x10] sm:$0xff]
        %v225 = vld [vmem:[%s221 + $0x18] sm:$0xff]
        %v226 = vld [vmem:[%s221 + $0x20] sm:$0xff]
        %v227 = vld [vmem:[%s221 + $0x28] sm:$0xff]
        %v228 = vld [vmem:[%s221 + $0x30] sm:$0xff]
        %v229 = vld [vmem:[%s221 + $0x38] sm:$0xff]
        %v230 = vld [vmem:[%s221 + $0x40] sm:$0xff]
        %v231 = vld [vmem:[%s221 + $0x48] sm:$0xff]
        %v232 = vld [vmem:[%s221 + $0x50] sm:$0xff]
        %v233 = vld [vmem:[%s221 + $0x58] sm:$0xff]
        %v234 = vld [vmem:[%s221 + $0x60] sm:$0xff]
        %v235 = vld [vmem:[%s221 + $0x68] sm:$0xff]
        %v236 = vld [vmem:[%s221 + $0x70] sm:$0xff]
        %v237 = vld [vmem:[%s221 + $0x78] sm:$0xff]
        %238 = vmatprep.subr.mxu0 0.0
        %239 = vmatpush1.msra.mxu0 %v222
        %240 = vmatprep.subr.mxu0 0.0
        %241 = vmatpush1.msra.mxu0 %v223
        %242 = vmatprep.subr.mxu0 0.0
        %243 = vmatpush1.msra.mxu0 %v224
        %244 = vmatprep.subr.mxu0 0.0
        %245 = vmatpush1.msra.mxu0 %v225
        %246 = vmatprep.subr.mxu0 0.0
        %247 = vmatpush1.msra.mxu0 %v226
        %248 = vmatprep.subr.mxu0 0.0
        %249 = vmatpush1.msra.mxu0 %v227
        %250 = vmatprep.subr.mxu0 0.0
        %251 = vmatpush1.msra.mxu0 %v228
        %252 = vmatprep.subr.mxu0 0.0
        %253 = vmatpush1.msra.mxu0 %v229
        %254 = vmatprep.subr.mxu0 0.0
        %255 = vmatpush1.msra.mxu0 %v230
        %256 = vmatprep.subr.mxu0 0.0
        %257 = vmatpush1.msra.mxu0 %v231
        %258 = vmatprep.subr.mxu0 0.0
        %259 = vmatpush1.msra.mxu0 %v232
        %260 = vmatprep.subr.mxu0 0.0
        %261 = vmatpush1.msra.mxu0 %v233
        %262 = vmatprep.subr.mxu0 0.0
        %263 = vmatpush1.msra.mxu0 %v234
        %264 = vmatprep.subr.mxu0 0.0
        %265 = vmatpush1.msra.mxu0 %v235
        %266 = vmatprep.subr.mxu0 0.0
        %267 = vmatpush1.msra.mxu0 %v236
        %268 = vmatprep.subr.mxu0 0.0
        %269 = vmatpush1.msra.mxu0 %v237
        %270 = vmatprep.subr.mxu0 0.0
        %271 = vmatpush1.msra.mxu0 0.0
        %272 = vmatprep.subr.mxu0 0.0
        %273 = vmatpush1.msra.mxu0 0.0
        %274 = vmatprep.subr.mxu0 0.0
        %275 = vmatpush1.msra.mxu0 0.0
        %276 = vmatprep.subr.mxu0 0.0
        %277 = vmatpush1.msra.mxu0 0.0
        %278 = vmatprep.subr.mxu0 0.0
        %279 = vmatpush1.msra.mxu0 0.0
        %280 = vmatprep.subr.mxu0 0.0
        %281 = vmatpush1.msra.mxu0 0.0
        %282 = vmatprep.subr.mxu0 0.0
        %283 = vmatpush1.msra.mxu0 0.0
        %284 = vmatprep.subr.mxu0 0.0
        %285 = vmatpush1.msra.mxu0 0.0
        %286 = vmatprep.subr.mxu0 0.0
        %287 = vmatpush1.msra.mxu0 0.0
        %288 = vmatprep.subr.mxu0 0.0
        %289 = vmatpush1.msra.mxu0 0.0
        %290 = vmatprep.subr.mxu0 0.0
        %291 = vmatpush1.msra.mxu0 0.0
        %292 = vmatprep.subr.mxu0 0.0
        %293 = vmatpush1.msra.mxu0 0.0
        %294 = vmatprep.subr.mxu0 0.0
        %295 = vmatpush1.msra.mxu0 0.0
        %296 = vmatprep.subr.mxu0 0.0
        %297 = vmatpush1.msra.mxu0 0.0
        %298 = vmatprep.subr.mxu0 0.0
        %299 = vmatpush1.msra.mxu0 0.0
        %300 = vmatprep.subr.mxu0 0.0
        %301 = vmatpush1.msra.mxu0 0.0
        %302 = vmatprep.mubr.f32.mxu0 0.0
        %303 = vmatmul.mubr.f32.gmra.mrb[0].mxu0 %v218
        %v304 = vpop.f32.mrb[0].mxu0
        %v305 = vadd.f32 0.0, %v304
        %v306 = vpop.f32.mrb[0].mxu0
        %307 = vmatprep.mubr.f32.mxu0 0.0
        %308 = vmatmul.mubr.f32.gmra.mrb[0].mxu0 %v219
        %v309 = vpop.f32.mrb[0].mxu0
        %v310 = vadd.f32 0.0, %v309
        %v311 = vpop.f32.mrb[0].mxu0
        %312 = vmatprep.mubr.f32.mxu0 0.0
        %313 = vmatmul.mubr.f32.gmra.mrb[0].mxu0 %v220
        %v314 = vpop.f32.mrb[0].mxu0
        %v315 = vadd.f32 0.0, %v314
        %v316 = vpop.f32.mrb[0].mxu0
        %317 = vdwg.mxu0
        %v318 = vadd.f32 %v215, %v305
        %v319 = vadd.f32 %v216, %v310
        %v320 = vadd.f32 %v217, %v315
        %321 = vst [vmem:[%s204] sm:$0xff] %v318
        %322 = vst [vmem:[%s204 + $0x8] sm:$0xff] %v319
        %323 = vst [vmem:[%s204 + $0x10] sm:$0xff] %v320
        %s324 = sand.u32 %s100, 1
        %s325 = scalar_lea.sflag [#allocation4], %s324
        %s326 = sand.u32 %s100, 1
        %s327 = smul.addr %s326, 24
        %s328 = scalar_lea.vmem [#allocation7], %s327
        // Predicated region
        $region41: #{tpu_custom_call.1} parent=27 // pred_check
          %p329 = pneg %p110
        $region42: #{tpu_custom_call.1} parent=27 // pred_check_branch
          %331 = sbr.rel (%p329) target = $region44
        $region43: #{tpu_custom_call.1} parent=27 // pred_region
          %s332 = smul.u32 3, %s26
          %s334 = ssub.s32 384, 384
          %335 = vsyncadd %s325, %s334
          %s336 = smul.addr %s332, 2
          %s337 = sadd.s32 %s25, %s336
          %s338 = smul.addr %s337, 128
          %s339 = scalar_lea.hbm %s2, %s338
          %s340 = sshll.u32 %s328, 4
          %s341 = int_to_ptr.vmem [resolvable:$true] %s340
          %346 = dma.vmem_to_hbm [thread:$0]  %s341, 384, %s339, %s325, 128, 256, 8
        $region44: #{tpu_custom_call.1} parent=27 // pred_fallthru
          _
      $region28: #{tpu_custom_call.1} parent=5 // pred_fallthru
        _
      %p347 = scmp.le.s32.totalorder 2, %s15
      // Predicated region
      $region45: #{tpu_custom_call.1} parent=5 // pred_check
        %p348 = pneg %p347
      $region46: #{tpu_custom_call.1} parent=5 // pred_check_branch
        %350 = sbr.rel (%p348) target = $region48
      $region47: #{tpu_custom_call.1} parent=5 // pred_region
        %s351 = ssub.s32 %s15, 2
        // Predicated region
        $region49: #{tpu_custom_call.1} parent=47 // pred_check
          %p352 = pneg %p116
        $region50: #{tpu_custom_call.1} parent=47 // pred_check_branch
          %354 = sbr.rel (%p352) target = $region52
        $region51: #{tpu_custom_call.1} parent=47 // pred_region
          %s355 = sand.u32 %s101, 1
          %s356 = scalar_lea.sflag [#allocation4], %s355
          %s357 = sand.u32 %s101, 1
          %s358 = smul.addr %s357, 24
          %s359 = scalar_lea.vmem [#allocation7], %s358
          %360 = dma.done %s356, 384
        $region52: #{tpu_custom_call.1} parent=47 // pred_fallthru
          _
      $region48: #{tpu_custom_call.1} parent=5 // pred_fallthru
        _
    $region6: #{tpu_custom_call.1} parent=1 // loop_footer
      %s19 = sadd.s32 1, %s15
    $region7: #{tpu_custom_call.1} parent=1 // loop_footer_branch
      %14 = sbr.rel target = $region3
    $region8: #{tpu_custom_call.1} parent=1 // loop_exit
      _
    %361 = vsyncpa [#allocation3], 1
    %s362 = scalar_lea.sflag [#allocation3], 1
    %363 = vsyncpa %s362, 1
    %364 = vsyncpa [#allocation6], 1
    %365 = vsyncpa [#allocation4], 1
    %s366 = scalar_lea.sflag [#allocation4], 1
    %367 = vsyncpa %s366, 1

</llo_original>
